<compile_context>
chip_gen: v6e
topology: v6e:2x2x1
jax: 0.10.0
libtpu: 0.0.40
codegen_flags: <defaults>
</compile_context>

<pallas_src>
import functools
import math

import jax
import jax.numpy as jnp
from jax import lax
from jax.experimental import pallas as pl
from jax.experimental.pallas import tpu as pltpu

_VMEM_LIMIT = 48 * 1024 * 1024  # headroom below v7x's 64 MiB physical VMEM


# ----------------------------- kernels --------------------------------------

def _encode_kernel(x_ref, w_ref, h_ref, hb_ref):
    # h = l2_normalize(relu(x @ W_enc)); also emit a bf16 copy for the next
    # layer's aggregation matmul (cast once here instead of per reduction step).
    h = jnp.dot(x_ref[...], w_ref[...], preferred_element_type=jnp.float32)
    h = jnp.maximum(h, 0.0)
    ss = jnp.sum(h * h, axis=1, keepdims=True)
    h = h * lax.rsqrt(jnp.maximum(ss, 1e-24))        # == h / max(||h||, 1e-12)
    h_ref[...] = h
    hb_ref[...] = h.astype(jnp.bfloat16)


def _layer_kernel(a_ref, hk_ref, hi_ref, z_ref, w_ih_ref, w_hh_ref,
                  b_ih_ref, b_hh_ref, h_out_ref, hb_out_ref, z_out_ref,
                  acc_ref, *, dim):
    k = pl.program_id(1)

    @pl.when(k == 0)
    def _():
        acc_ref[...] = jnp.zeros_like(acc_ref)

    # Stream one bf16 [tile, tile_k] block of A against the matching bf16
    # [tile_k, dim] rows of h (both pipelined from HBM), f32 accumulation.
    acc_ref[...] += jnp.dot(a_ref[...], hk_ref[...],
                            preferred_element_type=jnp.float32)

    @pl.when(k == pl.num_programs(1) - 1)
    def _():
        agg = acc_ref[...]                            # [tile, dim] f32
        h_prev = hi_ref[...]                          # [tile, dim] f32

        # GRUCell(agg, h_prev): gates in (r, z, n) order, matching torch.
        gi = jnp.dot(agg.astype(jnp.bfloat16), w_ih_ref[...],
                     preferred_element_type=jnp.float32) + b_ih_ref[...]
        gh = jnp.dot(h_prev.astype(jnp.bfloat16), w_hh_ref[...],
                     preferred_element_type=jnp.float32) + b_hh_ref[...]

        r = jax.nn.sigmoid(gi[:, 0 * dim:1 * dim] + gh[:, 0 * dim:1 * dim])
        zg = jax.nn.sigmoid(gi[:, 1 * dim:2 * dim] + gh[:, 1 * dim:2 * dim])
        n = jnp.tanh(gi[:, 2 * dim:3 * dim] + r * gh[:, 2 * dim:3 * dim])

        h_new = (1.0 - zg) * n + zg * h_prev
        ss = jnp.sum(h_new * h_new, axis=1, keepdims=True)
        h_new = h_new * lax.rsqrt(jnp.maximum(ss, 1e-24))

        h_out_ref[...] = h_new
        hb_out_ref[...] = h_new.astype(jnp.bfloat16)
        z_out_ref[...] = jnp.maximum(z_ref[...], h_new)   # running layer-wise max


def _decode_kernel(z_ref, w1_ref, w2_ref, y_ref):
    t = jnp.maximum(jnp.dot(z_ref[...], w1_ref[...],
                            preferred_element_type=jnp.float32), 0.0)
    y_ref[...] = jnp.dot(t, w2_ref[...], preferred_element_type=jnp.float32)


# ----------------------------- wrapper ---------------------------------------

def drbc_forward(x, A, params, *, dim, num_layers, tile=128):
    assert dim % 128 == 0, "hidden dim must be a multiple of 128 (lane width)"
    N = x.shape[0]
    Np = ((N + tile - 1) // tile) * tile
    n_tiles = Np // tile

    # Widen the reduction tile to cut per-grid-step overhead (Np % tile_k == 0).
    tile_k = next(t for t in (512, 256, 128) if Np % t == 0)
    n_k_tiles = Np // tile_k

    # ---- one-time packing / padding (plain-JAX glue, all tiny except A) ----
    x_pad = jnp.zeros((Np, 8), jnp.float32).at[:N, :3].set(x.astype(jnp.float32))
    A_pad = jnp.zeros((Np, Np), jnp.float32).at[:N, :N].set(A).astype(jnp.bfloat16)

    w_enc_pad = jnp.zeros((8, dim), jnp.float32).at[:3, :].set(params["w_enc"])
    w_ih_bf = params["w_ih"].astype(jnp.bfloat16)            # [dim, 3*dim]
    w_hh_bf = params["w_hh"].astype(jnp.bfloat16)            # [dim, 3*dim]
    b_ih = params["b_ih"]                                    # [1, 3*dim] f32
    b_hh = params["b_hh"]                                    # [1, 3*dim] f32
    w_d1 = params["w_d1"]                                    # [dim, dim//2]
    w_d2_pad = jnp.zeros((dim // 2, 128), jnp.float32).at[:, 0:1].set(params["w_d2"])

    cp_par = pltpu.CompilerParams(dimension_semantics=("parallel",),
                                  vmem_limit_bytes=_VMEM_LIMIT)
    cp_layer = pltpu.CompilerParams(dimension_semantics=("parallel", "arbitrary"),
                                    vmem_limit_bytes=_VMEM_LIMIT)

    # ---- encode ----
    h, hb = pl.pallas_call(
        _encode_kernel,
        out_shape=(jax.ShapeDtypeStruct((Np, dim), jnp.float32),
                   jax.ShapeDtypeStruct((Np, dim), jnp.bfloat16)),
        grid=(n_tiles,),
        in_specs=[pl.BlockSpec((tile, 8), lambda i: (i, 0)),
                  pl.BlockSpec((8, dim), lambda i: (0, 0))],
        out_specs=(pl.BlockSpec((tile, dim), lambda i: (i, 0)),
                   pl.BlockSpec((tile, dim), lambda i: (i, 0))),
        compiler_params=cp_par,
    )(x_pad, w_enc_pad)
    z = h  # running max over layer outputs starts at the encoded layer

    # ---- message passing + GRU layers (A and h streamed, tiled matmul) ----
    layer_fn = pl.pallas_call(
        functools.partial(_layer_kernel, dim=dim),
        out_shape=(jax.ShapeDtypeStruct((Np, dim), jnp.float32),
                   jax.ShapeDtypeStruct((Np, dim), jnp.bfloat16),
                   jax.ShapeDtypeStruct((Np, dim), jnp.float32)),
        grid=(n_tiles, n_k_tiles),                           # (row tiles, reduction)
        in_specs=[
            pl.BlockSpec((tile, tile_k), lambda i, k: (i, k)),   # A block (bf16)
            pl.BlockSpec((tile_k, dim), lambda i, k: (k, 0)),    # h rows (bf16, by k)
            pl.BlockSpec((tile, dim), lambda i, k: (i, 0)),      # h_prev rows (f32, by i)
            pl.BlockSpec((tile, dim), lambda i, k: (i, 0)),      # z row tile
            pl.BlockSpec((dim, 3 * dim), lambda i, k: (0, 0)),   # W_ih (bf16)
            pl.BlockSpec((dim, 3 * dim), lambda i, k: (0, 0)),   # W_hh (bf16)
            pl.BlockSpec((1, 3 * dim), lambda i, k: (0, 0)),     # b_ih
            pl.BlockSpec((1, 3 * dim), lambda i, k: (0, 0)),     # b_hh
        ],
        out_specs=(pl.BlockSpec((tile, dim), lambda i, k: (i, 0)),
                   pl.BlockSpec((tile, dim), lambda i, k: (i, 0)),
                   pl.BlockSpec((tile, dim), lambda i, k: (i, 0))),
        scratch_shapes=[pltpu.VMEM((tile, dim), jnp.float32)],
        compiler_params=cp_layer,
    )
    for _ in range(num_layers - 1):
        h, hb, z = layer_fn(A_pad, hb, h, z, w_ih_bf, w_hh_bf, b_ih, b_hh)

    # ---- decode (lane-dense [Np, 128] output, column 0 is the real score) ----
    y = pl.pallas_call(
        _decode_kernel,
        out_shape=jax.ShapeDtypeStruct((Np, 128), jnp.float32),
        grid=(n_tiles,),
        in_specs=[pl.BlockSpec((tile, dim), lambda i: (i, 0)),
                  pl.BlockSpec((dim, dim // 2), lambda i: (0, 0)),
                  pl.BlockSpec((dim // 2, 128), lambda i: (0, 0))],
        out_specs=pl.BlockSpec((tile, 128), lambda i: (i, 0)),
        compiler_params=cp_par,
    )(z, w_d1, w_d2_pad)

    return y[:N, 0]   # matches torch `y.view(-1)`


# ----------------------------- params / graph glue ---------------------------

def _xavier_uniform(key, shape_out_in):
    fan_out, fan_in = shape_out_in
    bound = math.sqrt(6.0 / (fan_in + fan_out))
    return jax.random.uniform(key, shape_out_in, jnp.float32, -bound, bound)


def init_params(key, dim):
    k = jax.random.split(key, 5)
    w_enc = _xavier_uniform(k[0], (dim, 3)).T              # Linear(3, dim, bias=False)
    w_d1 = _xavier_uniform(k[1], (dim // 2, dim)).T        # Linear(dim, dim//2, bias=False)
    w_d2 = _xavier_uniform(k[2], (1, dim // 2)).T          # Linear(dim//2, 1, bias=False)
    w_ih = _xavier_uniform(k[3], (3 * dim, dim)).T         # GRUCell weight_ih^T
    w_hh = _xavier_uniform(k[4], (3 * dim, dim)).T         # GRUCell weight_hh^T
    b_ih = jnp.full((1, 3 * dim), 0.01, jnp.float32)
    b_hh = jnp.full((1, 3 * dim), 0.01, jnp.float32)
    return dict(w_enc=w_enc, w_ih=w_ih, w_hh=w_hh, b_ih=b_ih, b_hh=b_hh,
                w_d1=w_d1, w_d2=w_d2)


def build_dense_adjacency(edge_index, norm, num_nodes):
    # PyG MessagePassing(aggr='add'): out[i] = sum_{e: j->i} norm_e * h[j]
    src, dst = edge_index[0], edge_index[1]
    A = jnp.zeros((num_nodes, num_nodes), jnp.float32)
    A = A.at[dst, src].add(norm)
    return A


def drbc_reference(x, A, params, *, dim, num_layers):
    """Pure-JAX f32 reference mirroring the PyTorch forward."""
    def l2n(h):
        n = jnp.sqrt(jnp.sum(h * h, axis=1, keepdims=True))
        return h / jnp.maximum(n, 1e-12)
    h = l2n(jax.nn.relu(x @ params["w_enc"]))
    z = h
    for _ in range(num_layers - 1):
        agg = A @ h
        gi = agg @ params["w_ih"] + params["b_ih"]
        gh = h @ params["w_hh"] + params["b_hh"]
        r = jax.nn.sigmoid(gi[:, :dim] + gh[:, :dim])
        zg = jax.nn.sigmoid(gi[:, dim:2 * dim] + gh[:, dim:2 * dim])
        n = jnp.tanh(gi[:, 2 * dim:] + r * gh[:, 2 * dim:])
        h = l2n((1.0 - zg) * n + zg * h)
        z = jnp.maximum(z, h)
    y = jax.nn.relu(z @ params["w_d1"]) @ params["w_d2"]
    return y.reshape(-1)


if __name__ == "__main__":
    N = 200          # nodes (not a tile multiple on purpose; padded to 256)
    DIM = 128        # DrBC hidden size (128-lane aligned)
    NUM_LAYERS = 3

    key = jax.random.PRNGKey(0)
    k_feat, k_param = jax.random.split(key, 2)

    # node features [deg, 1, 1]
    deg_feat = jax.random.randint(k_feat, (N,), 1, 5).astype(jnp.float32)
    x = jnp.stack([deg_feat, jnp.ones(N), jnp.ones(N)], axis=1)          # [N, 3]

    # deterministic graph: ring edges (both directions) + self loops
    idx = jnp.arange(N)
    src = jnp.concatenate([idx, (idx + 1) % N, idx])
    dst = jnp.concatenate([(idx + 1) % N, idx, idx])
    edge_index = jnp.stack([src, dst], axis=0)                           # [2, 3N]

    deg = jnp.zeros(N).at[dst].add(1.0)
    norm = 1.0 / jnp.sqrt((deg[src] + 1.0) * (deg[dst] + 1.0))           # [E]
    A = build_dense_adjacency(edge_index, norm, N)

    params = init_params(k_param, DIM)

    y = drbc_forward(x, A, params, dim=DIM, num_layers=NUM_LAYERS)
    jax.block_until_ready(y)
    assert y.shape == (N,)
    assert bool(jnp.all(jnp.isfinite(y)))

    y_ref = drbc_reference(x, A, params, dim=DIM, num_layers=NUM_LAYERS)
    max_err = float(jnp.max(jnp.abs(y - y_ref)))
    assert max_err < 5e-2, f"kernel/reference mismatch: max_err={max_err}"

    print("KERNEL_OK")
</pallas_src>

<mosaic_0001>
module attributes {stable_mosaic.version = 11 : i64} {
  func.func @_encode_kernel(%arg0: i32, %arg1: memref<128x8xf32, #tpu.memory_space<vmem>>, %arg2: memref<8x128xf32, #tpu.memory_space<vmem>>, %arg3: memref<128x128xf32, #tpu.memory_space<vmem>>, %arg4: memref<128x128xbf16, #tpu.memory_space<vmem>>) attributes {dimension_semantics = [#tpu.dimension_semantics<parallel>], iteration_bounds = array<i64: 2>, scalar_prefetch = 0 : i64, scratch_operands = 0 : i64, tpu.core_type = #tpu.core_type<tc>, window_params = [{transform_indices = @transform_0, window_bounds = array<i64: 128, 8>}, {pipeline_mode = #tpu.pipeline_mode<synchronous>, transform_indices = @transform_1, window_bounds = array<i64: 8, 128>}, {transform_indices = @transform_2, window_bounds = array<i64: 128, 128>}, {transform_indices = @transform_3, window_bounds = array<i64: 128, 128>}]} {
    %c0 = arith.constant 0 : index
    %c0_0 = arith.constant 0 : index
    %0 = vector.load %arg1[%c0, %c0_0] : memref<128x8xf32, #tpu.memory_space<vmem>>, vector<128x8xf32>
    %c0_1 = arith.constant 0 : index
    %c0_2 = arith.constant 0 : index
    %1 = vector.load %arg2[%c0_1, %c0_2] : memref<8x128xf32, #tpu.memory_space<vmem>>, vector<8x128xf32>
    %cst = arith.constant dense<0.000000e+00> : vector<128x128xf32>
    %2 = tpu.matmul %0, %1, %cst {dimension_numbers = #tpu.dot_dimension_numbers<[1], [0], [0], [1], [0, 0, 1, 1], [], []>} : vector<128x8xf32>, vector<8x128xf32>, vector<128x128xf32> -> vector<128x128xf32>
    %cst_3 = arith.constant 0.000000e+00 : f32
    %3 = vector.broadcast %cst_3 : f32 to vector<128x128xf32>
    %4 = arith.maximumf %2, %3 : vector<128x128xf32>
    %5 = arith.mulf %4, %4 : vector<128x128xf32>
    %cst_4 = arith.constant dense<0.000000e+00> : vector<128xf32>
    %6 = vector.multi_reduction <add>, %5, %cst_4 [1] : vector<128x128xf32> to vector<128xf32>
    %7 = vector.shape_cast %6 : vector<128xf32> to vector<128x1xf32>
    %cst_5 = arith.constant 1.000000e-24 : f32
    %8 = vector.broadcast %cst_5 : f32 to vector<128x1xf32>
    %9 = arith.maximumf %7, %8 : vector<128x1xf32>
    %10 = math.rsqrt %9 : vector<128x1xf32>
    %11 = vector.broadcast %10 : vector<128x1xf32> to vector<128x128xf32>
    %12 = arith.mulf %4, %11 : vector<128x128xf32>
    %c0_6 = arith.constant 0 : index
    %c0_7 = arith.constant 0 : index
    %13 = vector.load %arg3[%c0_6, %c0_7] : memref<128x128xf32, #tpu.memory_space<vmem>>, vector<128x128xf32>
    tpu.vector_store %arg3[%c0_6, %c0_7], %12 {strides = array<i32>} : memref<128x128xf32, #tpu.memory_space<vmem>>, vector<128x128xf32>,
    %14 = arith.truncf %12 : vector<128x128xf32> to vector<128x128xbf16>
    %c0_8 = arith.constant 0 : index
    %c0_9 = arith.constant 0 : index
    %15 = vector.load %arg4[%c0_8, %c0_9] : memref<128x128xbf16, #tpu.memory_space<vmem>>, vector<128x128xbf16>
    tpu.vector_store %arg4[%c0_8, %c0_9], %14 {strides = array<i32>} : memref<128x128xbf16, #tpu.memory_space<vmem>>, vector<128x128xbf16>,
    return
  }
  func.func @transform_0(%arg0: i32) -> (i32, i32) {
    %c0_i32 = arith.constant 0 : i32
    %c0_i32_0 = arith.constant 0 : i32
    return %arg0, %c0_i32 : i32, i32
  }
  func.func @transform_1(%arg0: i32) -> (i32, i32) {
    %c0_i32 = arith.constant 0 : i32
    %c0_i32_0 = arith.constant 0 : i32
    %c0_i32_1 = arith.constant 0 : i32
    return %c0_i32, %c0_i32_0 : i32, i32
  }
  func.func @transform_2(%arg0: i32) -> (i32, i32) {
    %c0_i32 = arith.constant 0 : i32
    %c0_i32_0 = arith.constant 0 : i32
    return %arg0, %c0_i32 : i32, i32
  }
  func.func @transform_3(%arg0: i32) -> (i32, i32) {
    %c0_i32 = arith.constant 0 : i32
    %c0_i32_0 = arith.constant 0 : i32
    return %arg0, %c0_i32 : i32, i32
  }
}

</mosaic_0001>

<llo_original>
// kernel: tpu_custom_call.1
$region0: #{tpu_custom_call.1}
  #allocation0 [shape = 'u32[]', space=smem, size = 0x4, offset = 0x4, fixed_abs, tag = 'smem constant byte address 0x4 - core index']
  #allocation1 [shape = 'u32[144,128]{1,0:T(1,128)}', space=vmem, size = 0x12000, scoped, tag = 'internal scratch']
  %s0 = inlined_call_operand.vmem [shape: f32[256,8], index: 0, kind: input, shape index: {}]
  %s1 = inlined_call_operand.vmem [shape: f32[8,128], index: 1, kind: input, shape index: {}]
  %s2 = inlined_call_operand.hbm [shape: f32[256,128], index: 2, kind: output, shape index: {0}]
  %s3 = inlined_call_operand.hbm [shape: bf16[256,128], index: 3, kind: output, shape index: {1}]
  %4 = xla_tuple %s2, %s3
  %s5 = sld [smem:[#allocation0]]
  $region49: #{tpu_custom_call.1} parent=0
    _
  %s7 = ssub.s32 1, %s5
  %s8 = scalar_select 0, %s7, %s5
  $region1: #{tpu_custom_call.1} parent=0
    #allocation2 [shape = 'u8[131072]{0}', space=vmem, size = 0x20000, scoped, tag = 'output window, operand 0']
    #allocation3 [shape = 's32[2]{0}', space=sflag, size = 0x8, scoped, tag = 'scoped memory for tpu_custom_call.1']
    #allocation4 [shape = 'u8[65536]{0}', space=vmem, size = 0x10000, scoped, tag = 'output window, operand 1']
    #allocation5 [shape = 's32[2]{0}', space=sflag, size = 0x8, scoped, tag = 'scoped memory for tpu_custom_call.1']
    %9 = vsyncpa [#allocation3], 0
    %s10 = scalar_lea.sflag [#allocation3], 1
    %11 = vsyncpa %s10, 0
    %12 = vsyncpa [#allocation5], 0
    %s13 = scalar_lea.sflag [#allocation5], 1
    %14 = vsyncpa %s13, 0
    loop: start=0, step=1, limit=4
    $region2: #{tpu_custom_call.1} parent=1 // loop_pre_header
      _
    $region3: #{tpu_custom_call.1} parent=1 // loop_header
      %s16 = sphi 0, %s20
      %p17 = scmp.ge.s32.totalorder %s16, 4
      %s26 = sphi 0, %s28
      %s29 = sphi 0, %s26
      %s30 = sphi 0, %s29
      %s46 = sphi 0, %s30
      %s50 = sphi 0, %s50
      %s52 = sphi 0, %s50
      %s53 = sphi 0, %s52
      %s67 = sphi 0, %s53
      %s73 = sphi 0, %s75
      %s76 = sphi 0, %s73
      %s77 = sphi 0, %s76
      %s93 = sphi 0, %s77
      %s99 = sphi 0, %s101
      %s102 = sphi 0, %s99
      %s103 = sphi 0, %s102
      %s119 = sphi 0, %s103
    $region4: #{tpu_custom_call.1} parent=1 // loop_header_branch
      %19 = sbr.rel (%p17) target = $region8
    $region5: #{tpu_custom_call.1} parent=1 // loop_body
      %s21 = ssub.s32 %s16, 1
      %s22 = ssub.s32 %s16, 2
      %s23 = sadd.s32 %s16, 1
      %s24 = ssub.s32 %s16, %s23
      %p25 = scmp.eq.s32.totalorder %s24, 0
      %s27 = sadd.s32 %s26, 1
      %s28 = scalar_select %p25, %s26, %s27
      %p31 = pneg %p25
      %p32 = scmp.eq.s32.totalorder %s16, 1
      %p33 = por %p31, %p32
      %p34 = scmp.ne.s32.totalorder %s26, %s29
      %p35 = scmp.eq.s32.totalorder %s16, 0
      %p36 = por %p34, %p35
      %p37 = scmp.ne.s32.totalorder %s26, %s29
      %p38 = scmp.eq.s32.totalorder %s21, 1
      %p39 = por %p37, %p38
      %p40 = scmp.ne.s32.totalorder %s29, %s30
      %p41 = scmp.eq.s32.totalorder %s21, 0
      %p42 = por %p40, %p41
      %p43 = scmp.ne.s32.totalorder %s29, %s30
      %p44 = scmp.eq.s32.totalorder %s22, 1
      %p45 = por %p43, %p44
      %p47 = scmp.ne.s32.totalorder %s30, %s46
      %p48 = scmp.eq.s32.totalorder %s22, 0
      %p49 = por %p47, %p48
      %s51 = sadd.s32 %s50, 1
      %p54 = scmp.eq.s32.totalorder %s16, 1
      %p55 = scmp.ne.s32.totalorder %s50, %s52
      %p56 = scmp.eq.s32.totalorder %s16, 0
      %p57 = por %p55, %p56
      %p58 = scmp.ne.s32.totalorder %s50, %s52
      %p59 = scmp.eq.s32.totalorder %s21, 1
      %p60 = por %p58, %p59
      %p61 = scmp.ne.s32.totalorder %s52, %s53
      %p62 = scmp.eq.s32.totalorder %s21, 0
      %p63 = por %p61, %p62
      %p64 = scmp.ne.s32.totalorder %s52, %s53
      %p65 = scmp.eq.s32.totalorder %s22, 1
      %p66 = por %p64, %p65
      %p68 = scmp.ne.s32.totalorder %s53, %s67
      %p69 = scmp.eq.s32.totalorder %s22, 0
      %p70 = por %p68, %p69
      %s71 = ssub.s32 %s16, %s23
      %p72 = scmp.eq.s32.totalorder %s71, 0
      %s74 = sadd.s32 %s73, 1
      %s75 = scalar_select %p72, %s73, %s74
      %p78 = pneg %p72
      %p79 = scmp.eq.s32.totalorder %s16, 1
      %p80 = por %p78, %p79
      %p81 = scmp.ne.s32.totalorder %s73, %s76
      %p82 = scmp.eq.s32.totalorder %s16, 0
      %p83 = por %p81, %p82
      %p84 = scmp.ne.s32.totalorder %s73, %s76
      %p85 = scmp.eq.s32.totalorder %s21, 1
      %p86 = por %p84, %p85
      %p87 = scmp.ne.s32.totalorder %s76, %s77
      %p88 = scmp.eq.s32.totalorder %s21, 0
      %p89 = por %p87, %p88
      %p90 = scmp.ne.s32.totalorder %s76, %s77
      %p91 = scmp.eq.s32.totalorder %s22, 1
      %p92 = por %p90, %p91
      %p94 = scmp.ne.s32.totalorder %s77, %s93
      %p95 = scmp.eq.s32.totalorder %s22, 0
      %p96 = por %p94, %p95
      %s97 = ssub.s32 %s16, %s23
      %p98 = scmp.eq.s32.totalorder %s97, 0
      %s100 = sadd.s32 %s99, 1
      %s101 = scalar_select %p98, %s99, %s100
      %p104 = pneg %p98
      %p105 = scmp.eq.s32.totalorder %s16, 1
      %p106 = por %p104, %p105
      %p107 = scmp.ne.s32.totalorder %s99, %s102
      %p108 = scmp.eq.s32.totalorder %s16, 0
      %p109 = por %p107, %p108
      %p110 = scmp.ne.s32.totalorder %s99, %s102
      %p111 = scmp.eq.s32.totalorder %s21, 1
      %p112 = por %p110, %p111
      %p113 = scmp.ne.s32.totalorder %s102, %s103
      %p114 = scmp.eq.s32.totalorder %s21, 0
      %p115 = por %p113, %p114
      %p116 = scmp.ne.s32.totalorder %s102, %s103
      %p117 = scmp.eq.s32.totalorder %s22, 1
      %p118 = por %p116, %p117
      %p120 = scmp.ne.s32.totalorder %s103, %s119
      %p121 = scmp.eq.s32.totalorder %s22, 0
      %p122 = por %p120, %p121
      %p123 = scmp.le.s32.totalorder 1, %s16
      %p124 = scmp.lt.s32.totalorder %s16, 3
      %p125 = pnand %p123, %p124
      %p126 = pneg %p125
      // Predicated region
      $region9: #{tpu_custom_call.1} parent=5 // pred_check
        _
      $region10: #{tpu_custom_call.1} parent=5 // pred_check_branch
        %128 = sbr.rel (%p125) target = $region12
      $region11: #{tpu_custom_call.1} parent=5 // pred_region
        %s129 = ssub.s32 %s16, 1
        // Predicated region
        $region13: #{tpu_custom_call.1} parent=11 // pred_check
          %p130 = pneg %p63
        $region14: #{tpu_custom_call.1} parent=11 // pred_check_branch
          %132 = sbr.rel (%p130) target = $region16
        $region15: #{tpu_custom_call.1} parent=11 // pred_region
          _
        $region16: #{tpu_custom_call.1} parent=11 // pred_fallthru
          _
      $region12: #{tpu_custom_call.1} parent=5 // pred_fallthru
        _
      %p133 = scmp.lt.s32.totalorder %s16, 2
      // Predicated region
      $region17: #{tpu_custom_call.1} parent=5 // pred_check
        %p134 = pneg %p133
      $region18: #{tpu_custom_call.1} parent=5 // pred_check_branch
        %136 = sbr.rel (%p134) target = $region20
      $region19: #{tpu_custom_call.1} parent=5 // pred_region
        // Predicated region
        $region21: #{tpu_custom_call.1} parent=19 // pred_check
          %p137 = pneg %p36
        $region22: #{tpu_custom_call.1} parent=19 // pred_check_branch
          %139 = sbr.rel (%p137) target = $region24
        $region23: #{tpu_custom_call.1} parent=19 // pred_region
          %s140 = smul.u32 16, %s16
          %p141 = scmp.lt.s32.totalorder %s140, 31
          %s142 = scalar_select %p141, %s140, 31
          %s143 = smul.addr %s142, 8
          %s144 = scalar_lea.vmem %s0, %s143
          %s145 = smul.u32 16, %s16
        $region24: #{tpu_custom_call.1} parent=19 // pred_fallthru
          _
      $region20: #{tpu_custom_call.1} parent=5 // pred_fallthru
        _
      %p146 = scmp.le.s32.totalorder 1, %s16
      %p147 = scmp.lt.s32.totalorder %s16, 3
      %p148 = pnand %p146, %p147
      %p149 = pneg %p148
      // Predicated region
      $region25: #{tpu_custom_call.1} parent=5 // pred_check
        _
      $region26: #{tpu_custom_call.1} parent=5 // pred_check_branch
        %151 = sbr.rel (%p148) target = $region28
      $region27: #{tpu_custom_call.1} parent=5 // pred_region
        %s152 = ssub.s32 %s16, 1
        %s153 = smul.u32 16, %s21
        %p154 = scmp.lt.s32.totalorder %s153, 31
        %s155 = scalar_select %p154, %s153, 31
        %s156 = smul.addr %s155, 8
        %s157 = scalar_lea.vmem %s0, %s156
        %p158 = pneg %p42
        %p159 = pneg %p39
        %p160 = pneg %p63
        %p161 = pneg %p60
        %p162 = pneg %p89
        %p163 = pneg %p86
        %s164 = sand.u32 %s76, 1
        %s165 = scalar_lea.sflag [#allocation3], %s164
        %s166 = sand.u32 %s76, 1
        %s167 = smul.addr %s166, 128
        %s168 = scalar_lea.vmem [#allocation2], %s167
        %p169 = pneg %p115
        %p170 = pneg %p112
        %s171 = sand.u32 %s102, 1
        %s172 = scalar_lea.sflag [#allocation5], %s171
        %s173 = sand.u32 %s102, 1
        %s174 = smul.addr %s173, 64
        %s175 = scalar_lea.vmem [#allocation4], %s174
        %s176 = smul.u32 16, %s21
        %p177 = scmp.lt.s32.totalorder %s176, 31
        %s178 = scalar_select %p177, %s176, 31
        %s179 = smul.addr %s178, 8
        %s180 = scalar_lea.vmem %s0, %s179
        %s181 = smul.u32 16, %s21
        %s182 = smul.u32 16, %s21
        %s183 = smul.u32 16, %s21
        %v184 = vld [vmem:[%s180] sm:$0xff]
        %v185 = vld [vmem:[%s180 + $0x8] sm:$0xff]
        %v186 = vld [vmem:[%s180 + $0x10] sm:$0xff]
        %v187 = vld [vmem:[%s180 + $0x18] sm:$0xff]
        %v188 = vld [vmem:[%s180 + $0x20] sm:$0xff]
        %v189 = vld [vmem:[%s180 + $0x28] sm:$0xff]
        %v190 = vld [vmem:[%s180 + $0x30] sm:$0xff]
        %v191 = vld [vmem:[%s180 + $0x38] sm:$0xff]
        %v192 = vld [vmem:[%s180 + $0x40] sm:$0xff]
        %v193 = vld [vmem:[%s180 + $0x48] sm:$0xff]
        %v194 = vld [vmem:[%s180 + $0x50] sm:$0xff]
        %v195 = vld [vmem:[%s180 + $0x58] sm:$0xff]
        %v196 = vld [vmem:[%s180 + $0x60] sm:$0xff]
        %v197 = vld [vmem:[%s180 + $0x68] sm:$0xff]
        %v198 = vld [vmem:[%s180 + $0x70] sm:$0xff]
        %v199 = vld [vmem:[%s180 + $0x78] sm:$0xff]
        %v200 = vld [vmem:[%s1] sm:$0xff]
        %vm201 = vcmask 64512
        %v203 = vsel %vm201, %v184, 0
        %v206 = vsel %vm201, %v185, 0
        %v209 = vsel %vm201, %v186, 0
        %v212 = vsel %vm201, %v187, 0
        %v215 = vsel %vm201, %v188, 0
        %v218 = vsel %vm201, %v189, 0
        %v221 = vsel %vm201, %v190, 0
        %v224 = vsel %vm201, %v191, 0
        %v227 = vsel %vm201, %v192, 0
        %v230 = vsel %vm201, %v193, 0
        %v233 = vsel %vm201, %v194, 0
        %v236 = vsel %vm201, %v195, 0
        %v239 = vsel %vm201, %v196, 0
        %v242 = vsel %vm201, %v197, 0
        %v245 = vsel %vm201, %v198, 0
        %v248 = vsel %vm201, %v199, 0
        %250 = vmatprep.subr.mxu0 0.0
        %251 = vmatpush1.msra.mxu0 0.0
        %252 = vmatprep.subr.mxu0 0.0
        %253 = vmatpush1.msra.mxu0 0.0
        %254 = vmatprep.subr.mxu0 0.0
        %255 = vmatpush1.msra.mxu0 0.0
        %256 = vmatprep.subr.mxu0 0.0
        %257 = vmatpush1.msra.mxu0 0.0
        %258 = vmatprep.subr.mxu0 0.0
        %259 = vmatpush1.msra.mxu0 0.0
        %260 = vmatprep.subr.mxu0 0.0
        %261 = vmatpush1.msra.mxu0 0.0
        %262 = vmatprep.subr.mxu0 0.0
        %263 = vmatpush1.msra.mxu0 0.0
        %264 = vmatprep.subr.mxu0 0.0
        %265 = vmatpush1.msra.mxu0 0.0
        %266 = vmatprep.subr.mxu0 0.0
        %267 = vmatpush1.msra.mxu0 0.0
        %268 = vmatprep.subr.mxu0 0.0
        %269 = vmatpush1.msra.mxu0 0.0
        %270 = vmatprep.subr.mxu0 0.0
        %271 = vmatpush1.msra.mxu0 0.0
        %272 = vmatprep.subr.mxu0 0.0
        %273 = vmatpush1.msra.mxu0 0.0
        %274 = vmatprep.subr.mxu0 0.0
        %275 = vmatpush1.msra.mxu0 0.0
        %276 = vmatprep.subr.mxu0 0.0
        %277 = vmatpush1.msra.mxu0 0.0
        %278 = vmatprep.subr.mxu0 0.0
        %279 = vmatpush1.msra.mxu0 0.0
        %280 = vmatprep.subr.mxu0 0.0
        %281 = vmatpush1.msra.mxu0 %v200
        %282 = vmatprep.subr.mxu0 0.0
        %283 = vmatpush2.msra.mxu0 0.0
        %284 = vmatprep.subr.mxu0 0.0
        %285 = vmatpush2.msra.mxu0 0.0
        %286 = vmatprep.subr.mxu0 0.0
        %287 = vmatpush2.msra.mxu0 0.0
        %288 = vmatprep.subr.mxu0 0.0
        %289 = vmatpush2.msra.mxu0 0.0
        %290 = vmatprep.subr.mxu0 0.0
        %291 = vmatpush2.msra.mxu0 0.0
        %292 = vmatprep.subr.mxu0 0.0
        %293 = vmatpush2.msra.mxu0 0.0
        %294 = vmatprep.subr.mxu0 0.0
        %295 = vmatpush2.msra.mxu0 0.0
        %296 = vmatprep.subr.mxu0 0.0
        %297 = vmatpush2.msra.mxu0 0.0
        %298 = vmatprep.subr.mxu0 0.0
        %299 = vmatpush2.msra.mxu0 0.0
        %300 = vmatprep.subr.mxu0 0.0
        %301 = vmatpush2.msra.mxu0 0.0
        %302 = vmatprep.subr.mxu0 0.0
        %303 = vmatpush2.msra.mxu0 0.0
        %304 = vmatprep.subr.mxu0 0.0
        %305 = vmatpush2.msra.mxu0 0.0
        %306 = vmatprep.subr.mxu0 0.0
        %307 = vmatpush2.msra.mxu0 0.0
        %308 = vmatprep.subr.mxu0 0.0
        %309 = vmatpush2.msra.mxu0 0.0
        %310 = vmatprep.subr.mxu0 0.0
        %311 = vmatpush2.msra.mxu0 0.0
        %312 = vmatprep.subr.mxu0 0.0
        %313 = vmatpush2.msra.mxu0 0.0
        %314 = vmatprep.mubr.f32.mxu0 0.0
        %315 = vmatmul.mubr.f32.gmra.mxu0 %v203
        %v316 = vpop.f32.mrf.mxu0
        %v317 = vadd.f32 0.0, %v316
        %v318 = vpop.f32.mrf.mxu0
        %319 = vmatprep.mubr.f32.mxu0 0.0
        %320 = vmatmul.mubr.f32.gmra.mxu0 %v206
        %v321 = vpop.f32.mrf.mxu0
        %v322 = vadd.f32 0.0, %v321
        %v323 = vpop.f32.mrf.mxu0
        %324 = vmatprep.mubr.f32.mxu0 0.0
        %325 = vmatmul.mubr.f32.gmra.mxu0 %v209
        %v326 = vpop.f32.mrf.mxu0
        %v327 = vadd.f32 0.0, %v326
        %v328 = vpop.f32.mrf.mxu0
        %329 = vmatprep.mubr.f32.mxu0 0.0
        %330 = vmatmul.mubr.f32.gmra.mxu0 %v212
        %v331 = vpop.f32.mrf.mxu0
        %v332 = vadd.f32 0.0, %v331
        %v333 = vpop.f32.mrf.mxu0
        %334 = vmatprep.mubr.f32.mxu0 0.0
        %335 = vmatmul.mubr.f32.gmra.mxu0 %v215
        %v336 = vpop.f32.mrf.mxu0
        %v337 = vadd.f32 0.0, %v336
        %v338 = vpop.f32.mrf.mxu0
        %339 = vmatprep.mubr.f32.mxu0 0.0
        %340 = vmatmul.mubr.f32.gmra.mxu0 %v218
        %v341 = vpop.f32.mrf.mxu0
        %v342 = vadd.f32 0.0, %v341
        %v343 = vpop.f32.mrf.mxu0
        %344 = vmatprep.mubr.f32.mxu0 0.0
        %345 = vmatmul.mubr.f32.gmra.mxu0 %v221
        %v346 = vpop.f32.mrf.mxu0
        %v347 = vadd.f32 0.0, %v346
        %v348 = vpop.f32.mrf.mxu0
        %349 = vmatprep.mubr.f32.mxu0 0.0
        %350 = vmatmul.mubr.f32.gmra.mxu0 %v224
        %v351 = vpop.f32.mrf.mxu0
        %v352 = vadd.f32 0.0, %v351
        %v353 = vpop.f32.mrf.mxu0
        %354 = vmatprep.mubr.f32.mxu0 0.0
        %355 = vmatmul.mubr.f32.gmra.mxu0 %v227
        %v356 = vpop.f32.mrf.mxu0
        %v357 = vadd.f32 0.0, %v356
        %v358 = vpop.f32.mrf.mxu0
        %359 = vmatprep.mubr.f32.mxu0 0.0
        %360 = vmatmul.mubr.f32.gmra.mxu0 %v230
        %v361 = vpop.f32.mrf.mxu0
        %v362 = vadd.f32 0.0, %v361
        %v363 = vpop.f32.mrf.mxu0
        %364 = vmatprep.mubr.f32.mxu0 0.0
        %365 = vmatmul.mubr.f32.gmra.mxu0 %v233
        %v366 = vpop.f32.mrf.mxu0
        %v367 = vadd.f32 0.0, %v366
        %v368 = vpop.f32.mrf.mxu0
        %369 = vmatprep.mubr.f32.mxu0 0.0
        %370 = vmatmul.mubr.f32.gmra.mxu0 %v236
        %v371 = vpop.f32.mrf.mxu0
        %v372 = vadd.f32 0.0, %v371
        %v373 = vpop.f32.mrf.mxu0
        %374 = vmatprep.mubr.f32.mxu0 0.0
        %375 = vmatmul.mubr.f32.gmra.mxu0 %v239
        %v376 = vpop.f32.mrf.mxu0
        %v377 = vadd.f32 0.0, %v376
        %v378 = vpop.f32.mrf.mxu0
        %379 = vmatprep.mubr.f32.mxu0 0.0
        %380 = vmatmul.mubr.f32.gmra.mxu0 %v242
        %v381 = vpop.f32.mrf.mxu0
        %v382 = vadd.f32 0.0, %v381
        %v383 = vpop.f32.mrf.mxu0
        %384 = vmatprep.mubr.f32.mxu0 0.0
        %385 = vmatmul.mubr.f32.gmra.mxu0 %v245
        %v386 = vpop.f32.mrf.mxu0
        %v387 = vadd.f32 0.0, %v386
        %v388 = vpop.f32.mrf.mxu0
        %389 = vmatprep.mubr.f32.mxu0 0.0
        %390 = vmatmul.mubr.f32.gmra.mxu0 %v248
        %v391 = vpop.f32.mrf.mxu0
        %v392 = vadd.f32 0.0, %v391
        %v393 = vpop.f32.mrf.mxu0
        %394 = vdwg.mxu0
        %v395 = vmax.f32 %v317, 0.0
        %v396 = vmax.f32 %v322, 0.0
        %v397 = vmax.f32 %v327, 0.0
        %v398 = vmax.f32 %v332, 0.0
        %v399 = vmax.f32 %v337, 0.0
        %v400 = vmax.f32 %v342, 0.0
        %v401 = vmax.f32 %v347, 0.0
        %v402 = vmax.f32 %v352, 0.0
        %v403 = vmax.f32 %v357, 0.0
        %v404 = vmax.f32 %v362, 0.0
        %v405 = vmax.f32 %v367, 0.0
        %v406 = vmax.f32 %v372, 0.0
        %v407 = vmax.f32 %v377, 0.0
        %v408 = vmax.f32 %v382, 0.0
        %v409 = vmax.f32 %v387, 0.0
        %v410 = vmax.f32 %v392, 0.0
        %v411 = vmul.f32 %v395, %v395
        %v412 = vmul.f32 %v396, %v396
        %v413 = vmul.f32 %v397, %v397
        %v414 = vmul.f32 %v398, %v398
        %v415 = vmul.f32 %v399, %v399
        %v416 = vmul.f32 %v400, %v400
        %v417 = vmul.f32 %v401, %v401
        %v418 = vmul.f32 %v402, %v402
        %v419 = vmul.f32 %v403, %v403
        %v420 = vmul.f32 %v404, %v404
        %v421 = vmul.f32 %v405, %v405
        %v422 = vmul.f32 %v406, %v406
        %v423 = vmul.f32 %v407, %v407
        %v424 = vmul.f32 %v408, %v408
        %v425 = vmul.f32 %v409, %v409
        %v426 = vmul.f32 %v410, %v410
        %427 = vadd.xlane.f32.xlu0 %v411
        %v428 = vpop.xlane.xlu0 %427
        %429 = vadd.xlane.f32.xlu0 %v412
        %v430 = vpop.xlane.xlu0 %429
        %431 = vadd.xlane.f32.xlu0 %v413
        %v432 = vpop.xlane.xlu0 %431
        %433 = vadd.xlane.f32.xlu0 %v414
        %v434 = vpop.xlane.xlu0 %433
        %435 = vadd.xlane.f32.xlu0 %v415
        %v436 = vpop.xlane.xlu0 %435
        %437 = vadd.xlane.f32.xlu0 %v416
        %v438 = vpop.xlane.xlu0 %437
        %439 = vadd.xlane.f32.xlu0 %v417
        %v440 = vpop.xlane.xlu0 %439
        %441 = vadd.xlane.f32.xlu0 %v418
        %v442 = vpop.xlane.xlu0 %441
        %443 = vadd.xlane.f32.xlu0 %v419
        %v444 = vpop.xlane.xlu0 %443
        %445 = vadd.xlane.f32.xlu0 %v420
        %v446 = vpop.xlane.xlu0 %445
        %447 = vadd.xlane.f32.xlu0 %v421
        %v448 = vpop.xlane.xlu0 %447
        %449 = vadd.xlane.f32.xlu0 %v422
        %v450 = vpop.xlane.xlu0 %449
        %451 = vadd.xlane.f32.xlu0 %v423
        %v452 = vpop.xlane.xlu0 %451
        %453 = vadd.xlane.f32.xlu0 %v424
        %v454 = vpop.xlane.xlu0 %453
        %455 = vadd.xlane.f32.xlu0 %v425
        %v456 = vpop.xlane.xlu0 %455
        %457 = vadd.xlane.f32.xlu0 %v426
        %v458 = vpop.xlane.xlu0 %457
        %v459 = vmax.f32 %v428, 1e-24
        %v460 = vmax.f32 %v430, 1e-24
        %v461 = vmax.f32 %v432, 1e-24
        %v462 = vmax.f32 %v434, 1e-24
        %v463 = vmax.f32 %v436, 1e-24
        %v464 = vmax.f32 %v438, 1e-24
        %v465 = vmax.f32 %v440, 1e-24
        %v466 = vmax.f32 %v442, 1e-24
        %v467 = vmax.f32 %v444, 1e-24
        %v468 = vmax.f32 %v446, 1e-24
        %v469 = vmax.f32 %v448, 1e-24
        %v470 = vmax.f32 %v450, 1e-24
        %v471 = vmax.f32 %v452, 1e-24
        %v472 = vmax.f32 %v454, 1e-24
        %v473 = vmax.f32 %v456, 1e-24
        %v474 = vmax.f32 %v458, 1e-24
        %v475 = vrsqrt.pop %v459
        %v476 = vrsqrt.pop %v460
        %v477 = vrsqrt.pop %v461
        %v478 = vrsqrt.pop %v462
        %v479 = vrsqrt.pop %v463
        %v480 = vrsqrt.pop %v464
        %v481 = vrsqrt.pop %v465
        %v482 = vrsqrt.pop %v466
        %v483 = vrsqrt.pop %v467
        %v484 = vrsqrt.pop %v468
        %v485 = vrsqrt.pop %v469
        %v486 = vrsqrt.pop %v470
        %v487 = vrsqrt.pop %v471
        %v488 = vrsqrt.pop %v472
        %v489 = vrsqrt.pop %v473
        %v490 = vrsqrt.pop %v474
        %v491 = vmul.f32 %v395, %v475
        %v492 = vmul.f32 %v396, %v476
        %v493 = vmul.f32 %v397, %v477
        %v494 = vmul.f32 %v398, %v478
        %v495 = vmul.f32 %v399, %v479
        %v496 = vmul.f32 %v400, %v480
        %v497 = vmul.f32 %v401, %v481
        %v498 = vmul.f32 %v402, %v482
        %v499 = vmul.f32 %v403, %v483
        %v500 = vmul.f32 %v404, %v484
        %v501 = vmul.f32 %v405, %v485
        %v502 = vmul.f32 %v406, %v486
        %v503 = vmul.f32 %v407, %v487
        %v504 = vmul.f32 %v408, %v488
        %v505 = vmul.f32 %v409, %v489
        %v506 = vmul.f32 %v410, %v490
        %507 = vst [vmem:[%s168] sm:$0xff] %v491
        %508 = vst [vmem:[%s168 + $0x8] sm:$0xff] %v492
        %509 = vst [vmem:[%s168 + $0x10] sm:$0xff] %v493
        %510 = vst [vmem:[%s168 + $0x18] sm:$0xff] %v494
        %511 = vst [vmem:[%s168 + $0x20] sm:$0xff] %v495
        %512 = vst [vmem:[%s168 + $0x28] sm:$0xff] %v496
        %513 = vst [vmem:[%s168 + $0x30] sm:$0xff] %v497
        %514 = vst [vmem:[%s168 + $0x38] sm:$0xff] %v498
        %515 = vst [vmem:[%s168 + $0x40] sm:$0xff] %v499
        %516 = vst [vmem:[%s168 + $0x48] sm:$0xff] %v500
        %517 = vst [vmem:[%s168 + $0x50] sm:$0xff] %v501
        %518 = vst [vmem:[%s168 + $0x58] sm:$0xff] %v502
        %519 = vst [vmem:[%s168 + $0x60] sm:$0xff] %v503
        %520 = vst [vmem:[%s168 + $0x68] sm:$0xff] %v504
        %521 = vst [vmem:[%s168 + $0x70] sm:$0xff] %v505
        %522 = vst [vmem:[%s168 + $0x78] sm:$0xff] %v506
        %v523 = vpack.c.bf16 %v492, %v491
        %v524 = vpack.c.bf16 %v494, %v493
        %v525 = vpack.c.bf16 %v496, %v495
        %v526 = vpack.c.bf16 %v498, %v497
        %v527 = vpack.c.bf16 %v500, %v499
        %v528 = vpack.c.bf16 %v502, %v501
        %v529 = vpack.c.bf16 %v504, %v503
        %v530 = vpack.c.bf16 %v506, %v505
        %v539 = vunpack.c.l.b16 %v523
        %v540 = vunpack.c.h.b16 %v523
        %v541 = vunpack.c.l.b16 %v524
        %v542 = vunpack.c.h.b16 %v524
        %v543 = vunpack.c.l.b16 %v525
        %v544 = vunpack.c.h.b16 %v525
        %v545 = vunpack.c.l.b16 %v526
        %v546 = vunpack.c.h.b16 %v526
        %v547 = vunpack.c.l.b16 %v527
        %v548 = vunpack.c.h.b16 %v527
        %v549 = vunpack.c.l.b16 %v528
        %v550 = vunpack.c.h.b16 %v528
        %v551 = vunpack.c.l.b16 %v529
        %v552 = vunpack.c.h.b16 %v529
        %v553 = vunpack.c.l.b16 %v530
        %v554 = vunpack.c.h.b16 %v530
        %v555 = vpack.c.b16 %v539, %v539
        %v556 = vpack.c.b16 %v540, %v540
        %v557 = vpack.c.b16 %v541, %v541
        %v558 = vpack.c.b16 %v542, %v542
        %v559 = vpack.c.b16 %v543, %v543
        %v560 = vpack.c.b16 %v544, %v544
        %v561 = vpack.c.b16 %v545, %v545
        %v562 = vpack.c.b16 %v546, %v546
        %v563 = vpack.c.b16 %v547, %v547
        %v564 = vpack.c.b16 %v548, %v548
        %v565 = vpack.c.b16 %v549, %v549
        %v566 = vpack.c.b16 %v550, %v550
        %v567 = vpack.c.b16 %v551, %v551
        %v568 = vpack.c.b16 %v552, %v552
        %v569 = vpack.c.b16 %v553, %v553
        %v570 = vpack.c.b16 %v554, %v554
        %587 = vst [vmem:[%s175] sm:$0xf] %v555
        %588 = vst [vmem:[%s175 + $0x4] sm:$0xf] %v556
        %589 = vst [vmem:[%s175 + $0x8] sm:$0xf] %v557
        %590 = vst [vmem:[%s175 + $0xc] sm:$0xf] %v558
        %591 = vst [vmem:[%s175 + $0x10] sm:$0xf] %v559
        %592 = vst [vmem:[%s175 + $0x14] sm:$0xf] %v560
        %593 = vst [vmem:[%s175 + $0x18] sm:$0xf] %v561
        %594 = vst [vmem:[%s175 + $0x1c] sm:$0xf] %v562
        %595 = vst [vmem:[%s175 + $0x20] sm:$0xf] %v563
        %596 = vst [vmem:[%s175 + $0x24] sm:$0xf] %v564
        %597 = vst [vmem:[%s175 + $0x28] sm:$0xf] %v565
        %598 = vst [vmem:[%s175 + $0x2c] sm:$0xf] %v566
        %599 = vst [vmem:[%s175 + $0x30] sm:$0xf] %v567
        %600 = vst [vmem:[%s175 + $0x34] sm:$0xf] %v568
        %601 = vst [vmem:[%s175 + $0x38] sm:$0xf] %v569
        %602 = vst [vmem:[%s175 + $0x3c] sm:$0xf] %v570
        %s603 = sand.u32 %s76, 1
        %s604 = scalar_lea.sflag [#allocation3], %s603
        %s605 = sand.u32 %s76, 1
        %s606 = smul.addr %s605, 128
        %s607 = scalar_lea.vmem [#allocation2], %s606
        %s608 = sand.u32 %s102, 1
        %s609 = scalar_lea.sflag [#allocation5], %s608
        %s610 = sand.u32 %s102, 1
        %s611 = smul.addr %s610, 64
        %s612 = scalar_lea.vmem [#allocation4], %s611
        // Predicated region
        $region29: #{tpu_custom_call.1} parent=27 // pred_check
          %p613 = pneg %p86
        $region30: #{tpu_custom_call.1} parent=27 // pred_check_branch
          %615 = sbr.rel (%p613) target = $region32
        $region31: #{tpu_custom_call.1} parent=27 // pred_region
          %s616 = smul.u32 16, %s21
          %s618 = ssub.s32 2048, 2048
          %619 = vsyncadd %s604, %s618
          %s620 = smul.addr %s616, 128
          %s621 = scalar_lea.hbm %s2, %s620
          %s622 = sshll.u32 %s607, 4
          %s623 = int_to_ptr.vmem [resolvable:$true] %s622
          %628 = dma.vmem_to_hbm [thread:$0]  %s623, 2048, %s621, %s604, 128, 128, 8
        $region32: #{tpu_custom_call.1} parent=27 // pred_fallthru
          _
        // Predicated region
        $region33: #{tpu_custom_call.1} parent=27 // pred_check
          %p629 = pneg %p112
        $region34: #{tpu_custom_call.1} parent=27 // pred_check_branch
          %631 = sbr.rel (%p629) target = $region36
        $region35: #{tpu_custom_call.1} parent=27 // pred_region
          %s632 = smul.u32 16, %s21
          %s634 = ssub.s32 1024, 1024
          %635 = vsyncadd %s609, %s634
          %s636 = smul.addr %s632, 64
          %s637 = scalar_lea.hbm %s3, %s636
          %s638 = sshll.u32 %s612, 4
          %s639 = int_to_ptr.vmem [resolvable:$true] %s638
          %644 = dma.vmem_to_hbm [thread:$0]  %s639, 1024, %s637, %s609, 64, 64, 4
        $region36: #{tpu_custom_call.1} parent=27 // pred_fallthru
          _
      $region28: #{tpu_custom_call.1} parent=5 // pred_fallthru
        _
      %p645 = scmp.le.s32.totalorder 2, %s16
      // Predicated region
      $region37: #{tpu_custom_call.1} parent=5 // pred_check
        %p646 = pneg %p645
      $region38: #{tpu_custom_call.1} parent=5 // pred_check_branch
        %648 = sbr.rel (%p646) target = $region40
      $region39: #{tpu_custom_call.1} parent=5 // pred_region
        %s649 = ssub.s32 %s16, 2
        // Predicated region
        $region41: #{tpu_custom_call.1} parent=39 // pred_check
          %p650 = pneg %p92
        $region42: #{tpu_custom_call.1} parent=39 // pred_check_branch
          %652 = sbr.rel (%p650) target = $region44
        $region43: #{tpu_custom_call.1} parent=39 // pred_region
          %s653 = sand.u32 %s77, 1
          %s654 = scalar_lea.sflag [#allocation3], %s653
          %s655 = sand.u32 %s77, 1
          %s656 = smul.addr %s655, 128
          %s657 = scalar_lea.vmem [#allocation2], %s656
          %658 = dma.done %s654, 2048
        $region44: #{tpu_custom_call.1} parent=39 // pred_fallthru
          _
        // Predicated region
        $region45: #{tpu_custom_call.1} parent=39 // pred_check
          %p659 = pneg %p118
        $region46: #{tpu_custom_call.1} parent=39 // pred_check_branch
          %661 = sbr.rel (%p659) target = $region48
        $region47: #{tpu_custom_call.1} parent=39 // pred_region
          %s662 = sand.u32 %s103, 1
          %s663 = scalar_lea.sflag [#allocation5], %s662
          %s664 = sand.u32 %s103, 1
          %s665 = smul.addr %s664, 64
          %s666 = scalar_lea.vmem [#allocation4], %s665
          %667 = dma.done %s663, 1024
        $region48: #{tpu_custom_call.1} parent=39 // pred_fallthru
          _
      $region40: #{tpu_custom_call.1} parent=5 // pred_fallthru
        _
    $region6: #{tpu_custom_call.1} parent=1 // loop_footer
      %s20 = sadd.s32 1, %s16
    $region7: #{tpu_custom_call.1} parent=1 // loop_footer_branch
      %15 = sbr.rel target = $region3
    $region8: #{tpu_custom_call.1} parent=1 // loop_exit
      _
    %668 = vsyncpa [#allocation3], 1
    %s669 = scalar_lea.sflag [#allocation3], 1
    %670 = vsyncpa %s669, 1
    %671 = vsyncpa [#allocation5], 1
    %s672 = scalar_lea.sflag [#allocation5], 1
    %673 = vsyncpa %s672, 1

</llo_original>
